<compile_context>
chip_gen: v7x
topology: tpu7x:2x2x1
jax: 0.10.0
libtpu: 0.0.40
codegen_flags: <defaults>
</compile_context>

<pallas_src>
import jax
import jax.numpy as jnp
from jax.experimental import pallas as pl
from jax.experimental.pallas import tpu as pltpu

LANE = 128
SUBLANE = 8
NEG_BIG = -1e30  # finite "-inf" baked into padded logit bias columns


def _round_up(x, m):
    return (x + m - 1) // m * m


def _mlp_kernel(x_ref, w0_ref, b0_ref, w1_ref, b1_ref, w2_ref, b2_ref, o_ref):
    # x_ref: (TB, image_size) f32.  Weights bf16 [in(_pad), out_pad], biases f32 (1, out_pad).
    # Cast activations to bf16 just before each MXU pass; accumulate in f32.
    x = x_ref[...].astype(jnp.bfloat16)

    h0 = jnp.dot(x, w0_ref[...], preferred_element_type=jnp.float32) + b0_ref[...]
    h0 = jnp.maximum(h0, 0.0)

    h1 = jnp.dot(h0.astype(jnp.bfloat16), w1_ref[...],
                 preferred_element_type=jnp.float32) + b1_ref[...]
    h1 = jnp.maximum(h1, 0.0)

    # b2's padded columns hold NEG_BIG (and the matching w2 columns are zero),
    # so padded logits arrive pre-poisoned: no iota/where mask needed here.
    logits = jnp.dot(h1.astype(jnp.bfloat16), w2_ref[...],
                     preferred_element_type=jnp.float32) + b2_ref[...]

    # Numerically-stable log-softmax along the lane axis (exp/log -> EUP).
    m = jnp.max(logits, axis=-1, keepdims=True)
    shifted = logits - m
    lse = jnp.log(jnp.sum(jnp.exp(shifted), axis=-1, keepdims=True))
    o_ref[...] = shifted - lse


def _choose_batch_tile(batch, block_batch):
    """Balanced, sublane-aligned batch tiles; >=2 steps for large batches (v7x)."""
    tb_max = max(SUBLANE, _round_up(min(block_batch, batch), SUBLANE))
    n_steps = pl.cdiv(batch, tb_max)
    if n_steps == 1 and batch >= 256:
        n_steps = 2  # feed both v7x TensorCores once there is enough work
    return _round_up(pl.cdiv(batch, n_steps), SUBLANE)


def model_a_forward(x, params, *, block_batch=1024):
    """x: [B, image_size] float32; params: dict from init_params."""
    w0, b0, w1, b1, w2, b2 = (params[k] for k in ("w0", "b0", "w1", "b1", "w2", "b2"))
    n_out = int(params["n_out"])

    B, image_size = x.shape
    out_pad = w2.shape[1]

    tb = _choose_batch_tile(B, block_batch)
    b_pad = _round_up(B, tb)

    # Only the batch tail (if any) is padded; no feature pad, no dtype cast
    # outside the kernel.
    if b_pad != B:
        x = jnp.pad(x, ((0, b_pad - B), (0, 0)))

    resident = lambda: pl.BlockSpec(memory_space=pltpu.VMEM)  # untiled, VMEM-resident

    # VMEM budget: double-buffered x/out tiles + resident weights + headroom.
    tile_bytes = 2 * (tb * image_size * 4 + tb * out_pad * 4)
    weight_bytes = sum(int(a.size) * a.dtype.itemsize
                       for a in (w0, b0, w1, b1, w2, b2))
    vmem_limit = int(min(48 * 1024 * 1024,
                         _round_up(tile_bytes + weight_bytes + (8 << 20), 1 << 20)))

    out_padded = pl.pallas_call(
        _mlp_kernel,
        out_shape=jax.ShapeDtypeStruct((b_pad, out_pad), jnp.float32),
        grid=(b_pad // tb,),
        in_specs=[
            pl.BlockSpec((tb, image_size), lambda i: (i, 0)),  # x: tiled over batch
            resident(), resident(),                             # w0, b0
            resident(), resident(),                             # w1, b1
            resident(), resident(),                             # w2, b2
        ],
        out_specs=pl.BlockSpec((tb, out_pad), lambda i: (i, 0)),  # lane-dense output
        compiler_params=pltpu.CompilerParams(
            dimension_semantics=("parallel",),
            vmem_limit_bytes=vmem_limit,
        ),
    )(x, w0, b0, w1, b1, w2, b2)

    # TODO(synk): downstream consumers (NLL gather / argmax) can index the
    # padded (b_pad, 128) array directly to skip this extra slice pass.
    return out_padded[:B, :n_out]


def init_params(key, image_size, n_outputs):
    """Deterministic init; weights stored padded, [in(_pad), out_pad], bf16. Biases f32."""
    h0, h1 = 100, 50
    h0_pad = _round_up(h0, LANE)
    h1_pad = _round_up(h1, LANE)
    out_pad = _round_up(n_outputs, LANE)

    k0, k1, k2, k3, k4, k5 = jax.random.split(key, 6)

    def lin(kw, kb, fan_in, fan_out, fan_in_p, fan_out_p, bias_pad=0.0):
        bound = 1.0 / (fan_in ** 0.5)
        w = jax.random.uniform(kw, (fan_in, fan_out), jnp.float32, -bound, bound)
        b = jax.random.uniform(kb, (1, fan_out), jnp.float32, -bound, bound)
        wp = jnp.zeros((fan_in_p, fan_out_p), jnp.float32).at[:fan_in, :fan_out].set(w)
        bp = jnp.full((1, fan_out_p), bias_pad, jnp.float32).at[:, :fan_out].set(b)
        return wp.astype(jnp.bfloat16), bp  # bf16 weights for MXU; f32 bias

    # Layer 0 keeps its real (unpadded) contraction dim = image_size.
    w0, b0 = lin(k0, k1, image_size, h0, image_size, h0_pad)
    w1, b1 = lin(k2, k3, h0, h1, h0_pad, h1_pad)
    # Padded logit columns: zero weights + NEG_BIG bias => mask is free in-kernel.
    w2, b2 = lin(k4, k5, h1, n_outputs, h1_pad, out_pad, bias_pad=NEG_BIG)
    return {"w0": w0, "b0": b0, "w1": w1, "b1": b1, "w2": w2, "b2": b2,
            "n_out": n_outputs}


if __name__ == "__main__":
    key = jax.random.PRNGKey(0)
    k_in, k_par = jax.random.split(key)

    # Small MNIST-like setup: batch=8, image 1x8x8 -> image_size=64, 10 classes.
    B, C, H, W = 8, 1, 8, 8
    image_size = C * H * W
    n_outputs = 10

    x_img = jax.random.normal(k_in, (B, C, H, W), jnp.float32)
    x = x_img.reshape(-1, image_size)          # x.view(-1, image_size)

    params = init_params(k_par, image_size, n_outputs)

    out = model_a_forward(x, params)
    jax.block_until_ready(out)

    # Sanity: log_softmax rows should (approximately) exponentiate-sum to 1.
    row_sums = jnp.sum(jnp.exp(out), axis=1)
    assert out.shape == (B, n_outputs)
    assert bool(jnp.all(jnp.abs(row_sums - 1.0) < 1e-4))
    assert bool(jnp.all(jnp.isfinite(out)))

    print("KERNEL_OK")
</pallas_src>

<mosaic_0001>
module attributes {stable_mosaic.version = 11 : i64} {
  func.func @_mlp_kernel(%arg0: i32, %arg1: memref<8x64xf32, #tpu.memory_space<vmem>>, %arg2: memref<64x128xbf16, #tpu.memory_space<vmem>>, %arg3: memref<1x128xf32, #tpu.memory_space<vmem>>, %arg4: memref<128x128xbf16, #tpu.memory_space<vmem>>, %arg5: memref<1x128xf32, #tpu.memory_space<vmem>>, %arg6: memref<128x128xbf16, #tpu.memory_space<vmem>>, %arg7: memref<1x128xf32, #tpu.memory_space<vmem>>, %arg8: memref<8x128xf32, #tpu.memory_space<vmem>>) attributes {dimension_semantics = [#tpu.dimension_semantics<parallel>], iteration_bounds = array<i64: 1>, scalar_prefetch = 0 : i64, scratch_operands = 0 : i64, tpu.core_type = #tpu.core_type<tc>, window_params = [{transform_indices = @transform_0, window_bounds = array<i64: 8, 64>}, {pipeline_mode = #tpu.pipeline_mode<synchronous>, transform_indices = @transform_1, window_bounds = array<i64: 64, 128>}, {pipeline_mode = #tpu.pipeline_mode<synchronous>, transform_indices = @transform_2, window_bounds = array<i64: 1, 128>}, {pipeline_mode = #tpu.pipeline_mode<synchronous>, transform_indices = @transform_3, window_bounds = array<i64: 128, 128>}, {pipeline_mode = #tpu.pipeline_mode<synchronous>, transform_indices = @transform_4, window_bounds = array<i64: 1, 128>}, {pipeline_mode = #tpu.pipeline_mode<synchronous>, transform_indices = @transform_5, window_bounds = array<i64: 128, 128>}, {pipeline_mode = #tpu.pipeline_mode<synchronous>, transform_indices = @transform_6, window_bounds = array<i64: 1, 128>}, {transform_indices = @transform_7, window_bounds = array<i64: 8, 128>}]} {
    %c0 = arith.constant 0 : index
    %c0_0 = arith.constant 0 : index
    %0 = vector.load %arg1[%c0, %c0_0] : memref<8x64xf32, #tpu.memory_space<vmem>>, vector<8x64xf32>
    %1 = arith.truncf %0 : vector<8x64xf32> to vector<8x64xbf16>
    %c0_1 = arith.constant 0 : index
    %c0_2 = arith.constant 0 : index
    %2 = vector.load %arg2[%c0_1, %c0_2] : memref<64x128xbf16, #tpu.memory_space<vmem>>, vector<64x128xbf16>
    %cst = arith.constant dense<0.000000e+00> : vector<8x128xf32>
    %3 = tpu.matmul %1, %2, %cst {dimension_numbers = #tpu.dot_dimension_numbers<[1], [0], [0], [1], [0, 0, 1, 1], [], []>} : vector<8x64xbf16>, vector<64x128xbf16>, vector<8x128xf32> -> vector<8x128xf32>
    %c0_3 = arith.constant 0 : index
    %c0_4 = arith.constant 0 : index
    %4 = vector.load %arg3[%c0_3, %c0_4] : memref<1x128xf32, #tpu.memory_space<vmem>>, vector<1x128xf32>
    %5 = vector.broadcast %4 : vector<1x128xf32> to vector<8x128xf32>
    %6 = arith.addf %3, %5 : vector<8x128xf32>
    %cst_5 = arith.constant 0.000000e+00 : f32
    %7 = vector.broadcast %cst_5 : f32 to vector<8x128xf32>
    %8 = arith.maximumf %6, %7 : vector<8x128xf32>
    %9 = arith.truncf %8 : vector<8x128xf32> to vector<8x128xbf16>
    %c0_6 = arith.constant 0 : index
    %c0_7 = arith.constant 0 : index
    %10 = vector.load %arg4[%c0_6, %c0_7] : memref<128x128xbf16, #tpu.memory_space<vmem>>, vector<128x128xbf16>
    %cst_8 = arith.constant dense<0.000000e+00> : vector<8x128xf32>
    %11 = tpu.matmul %9, %10, %cst_8 {dimension_numbers = #tpu.dot_dimension_numbers<[1], [0], [0], [1], [0, 0, 1, 1], [], []>} : vector<8x128xbf16>, vector<128x128xbf16>, vector<8x128xf32> -> vector<8x128xf32>
    %c0_9 = arith.constant 0 : index
    %c0_10 = arith.constant 0 : index
    %12 = vector.load %arg5[%c0_9, %c0_10] : memref<1x128xf32, #tpu.memory_space<vmem>>, vector<1x128xf32>
    %13 = vector.broadcast %12 : vector<1x128xf32> to vector<8x128xf32>
    %14 = arith.addf %11, %13 : vector<8x128xf32>
    %cst_11 = arith.constant 0.000000e+00 : f32
    %15 = vector.broadcast %cst_11 : f32 to vector<8x128xf32>
    %16 = arith.maximumf %14, %15 : vector<8x128xf32>
    %17 = arith.truncf %16 : vector<8x128xf32> to vector<8x128xbf16>
    %c0_12 = arith.constant 0 : index
    %c0_13 = arith.constant 0 : index
    %18 = vector.load %arg6[%c0_12, %c0_13] : memref<128x128xbf16, #tpu.memory_space<vmem>>, vector<128x128xbf16>
    %cst_14 = arith.constant dense<0.000000e+00> : vector<8x128xf32>
    %19 = tpu.matmul %17, %18, %cst_14 {dimension_numbers = #tpu.dot_dimension_numbers<[1], [0], [0], [1], [0, 0, 1, 1], [], []>} : vector<8x128xbf16>, vector<128x128xbf16>, vector<8x128xf32> -> vector<8x128xf32>
    %c0_15 = arith.constant 0 : index
    %c0_16 = arith.constant 0 : index
    %20 = vector.load %arg7[%c0_15, %c0_16] : memref<1x128xf32, #tpu.memory_space<vmem>>, vector<1x128xf32>
    %21 = vector.broadcast %20 : vector<1x128xf32> to vector<8x128xf32>
    %22 = arith.addf %19, %21 : vector<8x128xf32>
    %cst_17 = arith.constant dense<0xFF800000> : vector<8xf32>
    %23 = vector.multi_reduction <maximumf>, %22, %cst_17 [1] : vector<8x128xf32> to vector<8xf32>
    %24 = vector.shape_cast %23 : vector<8xf32> to vector<8x1xf32>
    %25 = vector.broadcast %24 : vector<8x1xf32> to vector<8x128xf32>
    %26 = arith.subf %22, %25 : vector<8x128xf32>
    %27 = math.exp %26 : vector<8x128xf32>
    %cst_18 = arith.constant dense<0.000000e+00> : vector<8xf32>
    %28 = vector.multi_reduction <add>, %27, %cst_18 [1] : vector<8x128xf32> to vector<8xf32>
    %29 = vector.shape_cast %28 : vector<8xf32> to vector<8x1xf32>
    %30 = math.log %29 : vector<8x1xf32>
    %31 = vector.broadcast %30 : vector<8x1xf32> to vector<8x128xf32>
    %32 = arith.subf %26, %31 : vector<8x128xf32>
    %c0_19 = arith.constant 0 : index
    %c0_20 = arith.constant 0 : index
    %33 = vector.load %arg8[%c0_19, %c0_20] : memref<8x128xf32, #tpu.memory_space<vmem>>, vector<8x128xf32>
    tpu.vector_store %arg8[%c0_19, %c0_20], %32 {strides = array<i32>} : memref<8x128xf32, #tpu.memory_space<vmem>>, vector<8x128xf32>,
    return
  }
  func.func @transform_0(%arg0: i32) -> (i32, i32) {
    %c0_i32 = arith.constant 0 : i32
    %c0_i32_0 = arith.constant 0 : i32
    return %arg0, %c0_i32 : i32, i32
  }
  func.func @transform_1(%arg0: i32) -> (i32, i32) {
    %c0_i32 = arith.constant 0 : i32
    %c0_i32_0 = arith.constant 0 : i32
    %c0_i32_1 = arith.constant 0 : i32
    return %c0_i32, %c0_i32_0 : i32, i32
  }
  func.func @transform_2(%arg0: i32) -> (i32, i32) {
    %c0_i32 = arith.constant 0 : i32
    %c0_i32_0 = arith.constant 0 : i32
    %c0_i32_1 = arith.constant 0 : i32
    return %c0_i32, %c0_i32_0 : i32, i32
  }
  func.func @transform_3(%arg0: i32) -> (i32, i32) {
    %c0_i32 = arith.constant 0 : i32
    %c0_i32_0 = arith.constant 0 : i32
    %c0_i32_1 = arith.constant 0 : i32
    return %c0_i32, %c0_i32_0 : i32, i32
  }
  func.func @transform_4(%arg0: i32) -> (i32, i32) {
    %c0_i32 = arith.constant 0 : i32
    %c0_i32_0 = arith.constant 0 : i32
    %c0_i32_1 = arith.constant 0 : i32
    return %c0_i32, %c0_i32_0 : i32, i32
  }
  func.func @transform_5(%arg0: i32) -> (i32, i32) {
    %c0_i32 = arith.constant 0 : i32
    %c0_i32_0 = arith.constant 0 : i32
    %c0_i32_1 = arith.constant 0 : i32
    return %c0_i32, %c0_i32_0 : i32, i32
  }
  func.func @transform_6(%arg0: i32) -> (i32, i32) {
    %c0_i32 = arith.constant 0 : i32
    %c0_i32_0 = arith.constant 0 : i32
    %c0_i32_1 = arith.constant 0 : i32
    return %c0_i32, %c0_i32_0 : i32, i32
  }
  func.func @transform_7(%arg0: i32) -> (i32, i32) {
    %c0_i32 = arith.constant 0 : i32
    %c0_i32_0 = arith.constant 0 : i32
    return %arg0, %c0_i32 : i32, i32
  }
}

</mosaic_0001>

<llo_original>
// kernel: tpu_custom_call.1
$region0: #{tpu_custom_call.1}
  #allocation0 [shape = 'u32[]', space=smem, size = 0x4, offset = 0x4, fixed_abs, tag = 'smem constant byte address 0x4 - core index']
  #allocation1 [shape = 'u32[144,128]{1,0:T(1,128)}', space=vmem, size = 0x12000, scoped, tag = 'internal scratch']
  %s0 = inlined_call_operand.hbm [shape: f32[8,64], index: 0, kind: input, shape index: {}]
  %s1 = inlined_call_operand.hbm [shape: bf16[64,128], index: 1, kind: input, shape index: {}]
  %s2 = inlined_call_operand.vmem [shape: f32[1,128], index: 2, kind: input, shape index: {}]
  %s3 = inlined_call_operand.hbm [shape: bf16[128,128], index: 3, kind: input, shape index: {}]
  %s4 = inlined_call_operand.vmem [shape: f32[1,128], index: 4, kind: input, shape index: {}]
  %s5 = inlined_call_operand.hbm [shape: bf16[128,128], index: 5, kind: input, shape index: {}]
  %s6 = inlined_call_operand.vmem [shape: f32[1,128], index: 6, kind: input, shape index: {}]
  %s7 = inlined_call_operand.hbm [shape: f32[8,128], index: 7, kind: output, shape index: {}]
  %s8 = sld [smem:[#allocation0]]
  $region54: #{tpu_custom_call.1} parent=0
    _
  %s10 = ssub.s32 1, %s8
  %s11 = scalar_select 0, %s10, %s8
  $region1: #{tpu_custom_call.1} parent=0
    #allocation2 [shape = 'u8[4096]{0}', space=vmem, size = 0x1000, scoped, tag = 'input window, operand 0, single buffered']
    #allocation3 [shape = 's32[1]{0}', space=sflag, size = 0x4, scoped, tag = 'scoped memory for tpu_custom_call.1']
    #allocation4 [shape = 's32[1]{0}', space=sflag, size = 0x4, scoped, tag = 'scoped memory for tpu_custom_call.1']
    #allocation5 [shape = 'u8[16384]{0}', space=vmem, size = 0x4000, scoped, tag = 'input window, operand 1, single buffered']
    #allocation6 [shape = 's32[1]{0}', space=sflag, size = 0x4, scoped, tag = 'scoped memory for tpu_custom_call.1']
    #allocation7 [shape = 'u8[32768]{0}', space=vmem, size = 0x8000, scoped, tag = 'input window, operand 3, single buffered']
    #allocation8 [shape = 'u8[32768]{0}', space=vmem, size = 0x8000, scoped, tag = 'input window, operand 5, single buffered']
    #allocation9 [shape = 's32[1]{0}', space=sflag, size = 0x4, scoped, tag = 'scoped memory for tpu_custom_call.1']
    #allocation10 [shape = 'u8[4096]{0}', space=vmem, size = 0x1000, scoped, tag = 'output window, operand 0, single buffered']
    %12 = vsyncpa [#allocation3], 0
    %13 = vsyncpa [#allocation6], 0
    %14 = vsyncpa [#allocation9], 0
    %15 = vsyncpa [#allocation4], 0
    // Predicated region
    $region2: #{tpu_custom_call.1} parent=1 // pred_check
      _
    $region3: #{tpu_custom_call.1} parent=1 // pred_check_branch
      %17 = sbr.rel (0) target = $region5
    $region4: #{tpu_custom_call.1} parent=1 // pred_region
      %s19 = ssub.s32 128, 128
      %20 = vsyncadd [#allocation3], %s19
      %s22 = sshll.u32 [#allocation2], 4
      %s23 = int_to_ptr.vmem [resolvable:$true] %s22
      %25 = dma.hbm_to_vmem [thread:$0]  %s0, 128, %s23, [#allocation3]
    $region5: #{tpu_custom_call.1} parent=1 // pred_fallthru
      _
    // Predicated region
    $region6: #{tpu_custom_call.1} parent=1 // pred_check
      _
    $region7: #{tpu_custom_call.1} parent=1 // pred_check_branch
      %27 = sbr.rel (0) target = $region9
    $region8: #{tpu_custom_call.1} parent=1 // pred_region
      %s29 = ssub.s32 512, 512
      %30 = vsyncadd [#allocation6], %s29
      %s31 = sshll.u32 [#allocation5], 4
      %s32 = int_to_ptr.vmem [resolvable:$true] %s31
      %37 = dma.hbm_to_vmem [thread:$0]  %s1, 512, %s32, [#allocation6], 64, 64, 4
    $region9: #{tpu_custom_call.1} parent=1 // pred_fallthru
      _
    // Predicated region
    $region10: #{tpu_custom_call.1} parent=1 // pred_check
      _
    $region11: #{tpu_custom_call.1} parent=1 // pred_check_branch
      %39 = sbr.rel (0) target = $region13
    $region12: #{tpu_custom_call.1} parent=1 // pred_region
      _
    $region13: #{tpu_custom_call.1} parent=1 // pred_fallthru
      _
    // Predicated region
    $region14: #{tpu_custom_call.1} parent=1 // pred_check
      _
    $region15: #{tpu_custom_call.1} parent=1 // pred_check_branch
      %41 = sbr.rel (0) target = $region17
    $region16: #{tpu_custom_call.1} parent=1 // pred_region
      %s43 = ssub.s32 1024, 1024
      %44 = vsyncadd [#allocation6], %s43
      %s45 = sshll.u32 [#allocation7], 4
      %s46 = int_to_ptr.vmem [resolvable:$true] %s45
      %51 = dma.hbm_to_vmem [thread:$0]  %s3, 1024, %s46, [#allocation6], 64, 64, 4
    $region17: #{tpu_custom_call.1} parent=1 // pred_fallthru
      _
    // Predicated region
    $region18: #{tpu_custom_call.1} parent=1 // pred_check
      _
    $region19: #{tpu_custom_call.1} parent=1 // pred_check_branch
      %53 = sbr.rel (0) target = $region21
    $region20: #{tpu_custom_call.1} parent=1 // pred_region
      _
    $region21: #{tpu_custom_call.1} parent=1 // pred_fallthru
      _
    // Predicated region
    $region22: #{tpu_custom_call.1} parent=1 // pred_check
      _
    $region23: #{tpu_custom_call.1} parent=1 // pred_check_branch
      %55 = sbr.rel (0) target = $region25
    $region24: #{tpu_custom_call.1} parent=1 // pred_region
      %s57 = ssub.s32 1024, 1024
      %58 = vsyncadd [#allocation9], %s57
      %s59 = sshll.u32 [#allocation8], 4
      %s60 = int_to_ptr.vmem [resolvable:$true] %s59
      %65 = dma.hbm_to_vmem [thread:$0]  %s5, 1024, %s60, [#allocation9], 64, 64, 4
    $region25: #{tpu_custom_call.1} parent=1 // pred_fallthru
      _
    // Predicated region
    $region26: #{tpu_custom_call.1} parent=1 // pred_check
      _
    $region27: #{tpu_custom_call.1} parent=1 // pred_check_branch
      %67 = sbr.rel (0) target = $region29
    $region28: #{tpu_custom_call.1} parent=1 // pred_region
      _
    $region29: #{tpu_custom_call.1} parent=1 // pred_fallthru
      _
    // Predicated region
    $region30: #{tpu_custom_call.1} parent=1 // pred_check
      _
    $region31: #{tpu_custom_call.1} parent=1 // pred_check_branch
      %69 = sbr.rel (0) target = $region33
    $region32: #{tpu_custom_call.1} parent=1 // pred_region
      %70 = dma.done [#allocation3], 128
    $region33: #{tpu_custom_call.1} parent=1 // pred_fallthru
      _
    // Predicated region
    $region34: #{tpu_custom_call.1} parent=1 // pred_check
      _
    $region35: #{tpu_custom_call.1} parent=1 // pred_check_branch
      %72 = sbr.rel (0) target = $region37
    $region36: #{tpu_custom_call.1} parent=1 // pred_region
      %73 = dma.done [#allocation6], 512
    $region37: #{tpu_custom_call.1} parent=1 // pred_fallthru
      _
    // Predicated region
    $region38: #{tpu_custom_call.1} parent=1 // pred_check
      _
    $region39: #{tpu_custom_call.1} parent=1 // pred_check_branch
      %75 = sbr.rel (0) target = $region41
    $region40: #{tpu_custom_call.1} parent=1 // pred_region
      %76 = dma.done [#allocation6], 1024
    $region41: #{tpu_custom_call.1} parent=1 // pred_fallthru
      _
    // Predicated region
    $region42: #{tpu_custom_call.1} parent=1 // pred_check
      _
    $region43: #{tpu_custom_call.1} parent=1 // pred_check_branch
      %78 = sbr.rel (0) target = $region45
    $region44: #{tpu_custom_call.1} parent=1 // pred_region
      %79 = dma.done [#allocation9], 1024
    $region45: #{tpu_custom_call.1} parent=1 // pred_fallthru
      _
    %v81 = vld [vmem:[#allocation2] sm:$0xff]
    %v82 = vpack.c.bf16 %v81, %v81
    %v83 = vld [vmem:[#allocation5] sm:$0xf]
    %v84 = vld [vmem:[#allocation5 + $0x4] sm:$0xf]
    %v85 = vld [vmem:[#allocation5 + $0x8] sm:$0xf]
    %v86 = vld [vmem:[#allocation5 + $0xc] sm:$0xf]
    %v87 = vld [vmem:[#allocation5 + $0x10] sm:$0xf]
    %v88 = vld [vmem:[#allocation5 + $0x14] sm:$0xf]
    %v89 = vld [vmem:[#allocation5 + $0x18] sm:$0xf]
    %v90 = vld [vmem:[#allocation5 + $0x1c] sm:$0xf]
    %v91 = vld [vmem:[%s2] sm:$0x1]
    %v93 = vlaneseq
    %v94 = vshrl.u32 %v93, 7
    %v95 = vsub.s32 0, %v94
    %v96 = vrot.slane %v91, %v95
    %v106 = vunpack.c.l.b16 %v83
    %v107 = vunpack.c.l.b16 %v84
    %v108 = vunpack.c.l.b16 %v85
    %v109 = vunpack.c.l.b16 %v86
    %v110 = vunpack.c.l.b16 %v87
    %v111 = vunpack.c.l.b16 %v88
    %v112 = vunpack.c.l.b16 %v89
    %v113 = vunpack.c.l.b16 %v90
    %v114 = vpack.c.b16 %v107, %v106
    %v115 = vpack.c.b16 %v109, %v108
    %v116 = vpack.c.b16 %v111, %v110
    %v117 = vpack.c.b16 %v113, %v112
    %vm122 = vcmask 523264
    %v124 = vsel %vm122, %v82, 0
    %126 = vmatprep.subr.bf16.mxu0 0
    %127 = vmatpush1.bf16.msra.mxu0 %v114
    %128 = vmatprep.subr.bf16.mxu0 0
    %129 = vmatpush1.bf16.msra.mxu0 %v115
    %130 = vmatprep.subr.bf16.mxu0 0
    %131 = vmatpush1.bf16.msra.mxu0 %v116
    %132 = vmatprep.subr.bf16.mxu0 0
    %133 = vmatpush1.bf16.msra.mxu0 %v117
    %134 = vmatprep.subr.bf16.mxu0 0
    %135 = vmatpush1.bf16.msra.mxu0 0
    %136 = vmatprep.subr.bf16.mxu0 0
    %137 = vmatpush1.bf16.msra.mxu0 0
    %138 = vmatprep.subr.bf16.mxu0 0
    %139 = vmatpush1.bf16.msra.mxu0 0
    %140 = vmatprep.subr.bf16.mxu0 0
    %141 = vmatpush1.bf16.msra.mxu0 0
    %142 = vmatprep.subr.bf16.mxu0 0
    %143 = vmatpush1.bf16.msra.mxu0 0
    %144 = vmatprep.subr.bf16.mxu0 0
    %145 = vmatpush1.bf16.msra.mxu0 0
    %146 = vmatprep.subr.bf16.mxu0 0
    %147 = vmatpush1.bf16.msra.mxu0 0
    %148 = vmatprep.subr.bf16.mxu0 0
    %149 = vmatpush1.bf16.msra.mxu0 0
    %150 = vmatprep.subr.bf16.mxu0 0
    %151 = vmatpush1.bf16.msra.mxu0 0
    %152 = vmatprep.subr.bf16.mxu0 0
    %153 = vmatpush1.bf16.msra.mxu0 0
    %154 = vmatprep.subr.bf16.mxu0 0
    %155 = vmatpush1.bf16.msra.mxu0 0
    %156 = vmatprep.subr.bf16.mxu0 0
    %157 = vmatpush1.bf16.msra.mxu0 0
    %158 = vmatprep.mubr.bf16.mxu0 0
    %159 = vmatmul.mubr.bf16.gmra.mrb[0].mxu0 %v124
    %v160 = vpop.f32.mrb[0].mxu0
    %v161 = vadd.f32 %v96, %v160
    %v162 = vpop.f32.mrb[0].mxu0
    %v163 = vpop.f32.mrb[0].mxu0
    %v164 = vpop.f32.mrb[0].mxu0
    %165 = vdwg.mxu0
    %v166 = vmax.f32 %v161, 0.0
    %v167 = vpack.c.bf16 %v166, %v166
    %v168 = vld [vmem:[#allocation7] sm:$0xf]
    %v169 = vld [vmem:[#allocation7 + $0x4] sm:$0xf]
    %v170 = vld [vmem:[#allocation7 + $0x8] sm:$0xf]
    %v171 = vld [vmem:[#allocation7 + $0xc] sm:$0xf]
    %v172 = vld [vmem:[#allocation7 + $0x10] sm:$0xf]
    %v173 = vld [vmem:[#allocation7 + $0x14] sm:$0xf]
    %v174 = vld [vmem:[#allocation7 + $0x18] sm:$0xf]
    %v175 = vld [vmem:[#allocation7 + $0x1c] sm:$0xf]
    %v176 = vld [vmem:[#allocation7 + $0x20] sm:$0xf]
    %v177 = vld [vmem:[#allocation7 + $0x24] sm:$0xf]
    %v178 = vld [vmem:[#allocation7 + $0x28] sm:$0xf]
    %v179 = vld [vmem:[#allocation7 + $0x2c] sm:$0xf]
    %v180 = vld [vmem:[#allocation7 + $0x30] sm:$0xf]
    %v181 = vld [vmem:[#allocation7 + $0x34] sm:$0xf]
    %v182 = vld [vmem:[#allocation7 + $0x38] sm:$0xf]
    %v183 = vld [vmem:[#allocation7 + $0x3c] sm:$0xf]
    %v184 = vld [vmem:[%s4] sm:$0x1]
    %v186 = vlaneseq
    %v187 = vshrl.u32 %v186, 7
    %v188 = vsub.s32 0, %v187
    %v189 = vrot.slane %v184, %v188
    %v207 = vunpack.c.l.b16 %v168
    %v208 = vunpack.c.l.b16 %v169
    %v209 = vunpack.c.l.b16 %v170
    %v210 = vunpack.c.l.b16 %v171
    %v211 = vunpack.c.l.b16 %v172
    %v212 = vunpack.c.l.b16 %v173
    %v213 = vunpack.c.l.b16 %v174
    %v214 = vunpack.c.l.b16 %v175
    %v215 = vunpack.c.l.b16 %v176
    %v216 = vunpack.c.l.b16 %v177
    %v217 = vunpack.c.l.b16 %v178
    %v218 = vunpack.c.l.b16 %v179
    %v219 = vunpack.c.l.b16 %v180
    %v220 = vunpack.c.l.b16 %v181
    %v221 = vunpack.c.l.b16 %v182
    %v222 = vunpack.c.l.b16 %v183
    %v223 = vpack.c.b16 %v208, %v207
    %v224 = vpack.c.b16 %v210, %v209
    %v225 = vpack.c.b16 %v212, %v211
    %v226 = vpack.c.b16 %v214, %v213
    %v227 = vpack.c.b16 %v216, %v215
    %v228 = vpack.c.b16 %v218, %v217
    %v229 = vpack.c.b16 %v220, %v219
    %v230 = vpack.c.b16 %v222, %v221
    %239 = vmatprep.subr.bf16.mxu0 0
    %240 = vmatpush1.bf16.msra.mxu0 %v223
    %241 = vmatprep.subr.bf16.mxu0 0
    %242 = vmatpush1.bf16.msra.mxu0 %v224
    %243 = vmatprep.subr.bf16.mxu0 0
    %244 = vmatpush1.bf16.msra.mxu0 %v225
    %245 = vmatprep.subr.bf16.mxu0 0
    %246 = vmatpush1.bf16.msra.mxu0 %v226
    %247 = vmatprep.subr.bf16.mxu0 0
    %248 = vmatpush1.bf16.msra.mxu0 %v227
    %249 = vmatprep.subr.bf16.mxu0 0
    %250 = vmatpush1.bf16.msra.mxu0 %v228
    %251 = vmatprep.subr.bf16.mxu0 0
    %252 = vmatpush1.bf16.msra.mxu0 %v229
    %253 = vmatprep.subr.bf16.mxu0 0
    %254 = vmatpush1.bf16.msra.mxu0 %v230
    %255 = vmatprep.subr.bf16.mxu0 0
    %256 = vmatpush1.bf16.msra.mxu0 0
    %257 = vmatprep.subr.bf16.mxu0 0
    %258 = vmatpush1.bf16.msra.mxu0 0
    %259 = vmatprep.subr.bf16.mxu0 0
    %260 = vmatpush1.bf16.msra.mxu0 0
    %261 = vmatprep.subr.bf16.mxu0 0
    %262 = vmatpush1.bf16.msra.mxu0 0
    %263 = vmatprep.subr.bf16.mxu0 0
    %264 = vmatpush1.bf16.msra.mxu0 0
    %265 = vmatprep.subr.bf16.mxu0 0
    %266 = vmatpush1.bf16.msra.mxu0 0
    %267 = vmatprep.subr.bf16.mxu0 0
    %268 = vmatpush1.bf16.msra.mxu0 0
    %269 = vmatprep.subr.bf16.mxu0 0
    %270 = vmatpush1.bf16.msra.mxu0 0
    %271 = vmatprep.mubr.bf16.mxu0 0
    %272 = vmatmul.mubr.bf16.gmra.mrb[0].mxu0 %v167
    %v273 = vpop.f32.mrb[0].mxu0
    %v274 = vadd.f32 %v189, %v273
    %v275 = vpop.f32.mrb[0].mxu0
    %v276 = vpop.f32.mrb[0].mxu0
    %v277 = vpop.f32.mrb[0].mxu0
    %278 = vdwg.mxu0
    %v279 = vmax.f32 %v274, 0.0
    %v280 = vpack.c.bf16 %v279, %v279
    %v281 = vld [vmem:[#allocation8] sm:$0xf]
    %v282 = vld [vmem:[#allocation8 + $0x4] sm:$0xf]
    %v283 = vld [vmem:[#allocation8 + $0x8] sm:$0xf]
    %v284 = vld [vmem:[#allocation8 + $0xc] sm:$0xf]
    %v285 = vld [vmem:[#allocation8 + $0x10] sm:$0xf]
    %v286 = vld [vmem:[#allocation8 + $0x14] sm:$0xf]
    %v287 = vld [vmem:[#allocation8 + $0x18] sm:$0xf]
    %v288 = vld [vmem:[#allocation8 + $0x1c] sm:$0xf]
    %v289 = vld [vmem:[#allocation8 + $0x20] sm:$0xf]
    %v290 = vld [vmem:[#allocation8 + $0x24] sm:$0xf]
    %v291 = vld [vmem:[#allocation8 + $0x28] sm:$0xf]
    %v292 = vld [vmem:[#allocation8 + $0x2c] sm:$0xf]
    %v293 = vld [vmem:[#allocation8 + $0x30] sm:$0xf]
    %v294 = vld [vmem:[#allocation8 + $0x34] sm:$0xf]
    %v295 = vld [vmem:[#allocation8 + $0x38] sm:$0xf]
    %v296 = vld [vmem:[#allocation8 + $0x3c] sm:$0xf]
    %v297 = vld [vmem:[%s6] sm:$0x1]
    %v299 = vlaneseq
    %v300 = vshrl.u32 %v299, 7
    %v301 = vsub.s32 0, %v300
    %v302 = vrot.slane %v297, %v301
    %v320 = vunpack.c.l.b16 %v281
    %v321 = vunpack.c.l.b16 %v282
    %v322 = vunpack.c.l.b16 %v283
    %v323 = vunpack.c.l.b16 %v284
    %v324 = vunpack.c.l.b16 %v285
    %v325 = vunpack.c.l.b16 %v286
    %v326 = vunpack.c.l.b16 %v287
    %v327 = vunpack.c.l.b16 %v288
    %v328 = vunpack.c.l.b16 %v289
    %v329 = vunpack.c.l.b16 %v290
    %v330 = vunpack.c.l.b16 %v291
    %v331 = vunpack.c.l.b16 %v292
    %v332 = vunpack.c.l.b16 %v293
    %v333 = vunpack.c.l.b16 %v294
    %v334 = vunpack.c.l.b16 %v295
    %v335 = vunpack.c.l.b16 %v296
    %v336 = vpack.c.b16 %v321, %v320
    %v337 = vpack.c.b16 %v323, %v322
    %v338 = vpack.c.b16 %v325, %v324
    %v339 = vpack.c.b16 %v327, %v326
    %v340 = vpack.c.b16 %v329, %v328
    %v341 = vpack.c.b16 %v331, %v330
    %v342 = vpack.c.b16 %v333, %v332
    %v343 = vpack.c.b16 %v335, %v334
    %352 = vmatprep.subr.bf16.mxu0 0
    %353 = vmatpush1.bf16.msra.mxu0 %v336
    %354 = vmatprep.subr.bf16.mxu0 0
    %355 = vmatpush1.bf16.msra.mxu0 %v337
    %356 = vmatprep.subr.bf16.mxu0 0
    %357 = vmatpush1.bf16.msra.mxu0 %v338
    %358 = vmatprep.subr.bf16.mxu0 0
    %359 = vmatpush1.bf16.msra.mxu0 %v339
    %360 = vmatprep.subr.bf16.mxu0 0
    %361 = vmatpush1.bf16.msra.mxu0 %v340
    %362 = vmatprep.subr.bf16.mxu0 0
    %363 = vmatpush1.bf16.msra.mxu0 %v341
    %364 = vmatprep.subr.bf16.mxu0 0
    %365 = vmatpush1.bf16.msra.mxu0 %v342
    %366 = vmatprep.subr.bf16.mxu0 0
    %367 = vmatpush1.bf16.msra.mxu0 %v343
    %368 = vmatprep.subr.bf16.mxu0 0
    %369 = vmatpush1.bf16.msra.mxu0 0
    %370 = vmatprep.subr.bf16.mxu0 0
    %371 = vmatpush1.bf16.msra.mxu0 0
    %372 = vmatprep.subr.bf16.mxu0 0
    %373 = vmatpush1.bf16.msra.mxu0 0
    %374 = vmatprep.subr.bf16.mxu0 0
    %375 = vmatpush1.bf16.msra.mxu0 0
    %376 = vmatprep.subr.bf16.mxu0 0
    %377 = vmatpush1.bf16.msra.mxu0 0
    %378 = vmatprep.subr.bf16.mxu0 0
    %379 = vmatpush1.bf16.msra.mxu0 0
    %380 = vmatprep.subr.bf16.mxu0 0
    %381 = vmatpush1.bf16.msra.mxu0 0
    %382 = vmatprep.subr.bf16.mxu0 0
    %383 = vmatpush1.bf16.msra.mxu0 0
    %384 = vmatprep.mubr.bf16.mxu0 0
    %385 = vmatmul.mubr.bf16.gmra.mrb[0].mxu0 %v280
    %v386 = vpop.f32.mrb[0].mxu0
    %v387 = vadd.f32 %v302, %v386
    %v388 = vpop.f32.mrb[0].mxu0
    %v389 = vpop.f32.mrb[0].mxu0
    %v390 = vpop.f32.mrb[0].mxu0
    %391 = vdwg.mxu0
    %392 = vmax.xlane.f32.xlu0 %v387
    %v393 = vpop.xlane.xlu0 %392
    %v394 = vsub.f32 %v387, %v393
    %v395 = vmul.f32 %v394, 1.442695
    %v396 = vpow.pop %v395
    %397 = vadd.xlane.f32.xlu0 %v396
    %v398 = vpop.xlane.xlu0 %397
    %v399 = vlog2.pop %v398
    %v400 = vmul.f32 %v399, 0.6931472
    %v401 = vsub.f32 %v394, %v400
    %402 = vst [vmem:[#allocation10] sm:$0xff] %v401
    // Predicated region
    $region46: #{tpu_custom_call.1} parent=1 // pred_check
      _
    $region47: #{tpu_custom_call.1} parent=1 // pred_check_branch
      %404 = sbr.rel (0) target = $region49
    $region48: #{tpu_custom_call.1} parent=1 // pred_region
      %s406 = ssub.s32 128, 128
      %407 = vsyncadd [#allocation4], %s406
      %s409 = sshll.u32 [#allocation10], 4
      %s410 = int_to_ptr.vmem [resolvable:$true] %s409
      %412 = dma.vmem_to_hbm [thread:$0]  %s410, 128, %s7, [#allocation4]
    $region49: #{tpu_custom_call.1} parent=1 // pred_fallthru
      _
    // Predicated region
    $region50: #{tpu_custom_call.1} parent=1 // pred_check
      _
    $region51: #{tpu_custom_call.1} parent=1 // pred_check_branch
      %414 = sbr.rel (0) target = $region53
    $region52: #{tpu_custom_call.1} parent=1 // pred_region
      %415 = dma.done [#allocation4], 128
    $region53: #{tpu_custom_call.1} parent=1 // pred_fallthru
      _
    %416 = vsyncpa [#allocation3], 1
    %417 = vsyncpa [#allocation6], 1
    %418 = vsyncpa [#allocation9], 1
    %419 = vsyncpa [#allocation4], 1

</llo_original>
